<compile_context>
chip_gen: v7x
topology: tpu7x:2x2x1
jax: 0.10.0
libtpu: 0.0.40
codegen_flags: <defaults>
</compile_context>

<pallas_src>
import jax
import jax.numpy as jnp
from jax import lax
from jax.experimental import pallas as pl
from jax.experimental.pallas import tpu as pltpu


def basic_block_kernel(x_ref, w1_ref, s1_ref, b1_ref, w2_ref, s2_ref, b2_ref,
                       out_ref, col_ref):
    """One batch tile (NB images) per grid step.

    x_ref   : (NB, H, W*C) bf16   lane-dense input (also the residual)
    w1_ref  : (3*W*C, W*C) bf16   conv1 banded weights, kh taps stacked on K
    s1/b1   : (1, W*C) f32        folded BN1 scale / bias, tiled over W
    w2_ref  : (3*W*C, W*C) bf16   conv2 banded weights, kh-stacked
    s2/b2   : (1, W*C) f32        folded BN2 scale / bias
    out_ref : (NB, H, W*C) f32
    col_ref : VMEM scratch (NB, H, 3*W*C) bf16  kh-im2col buffer (reused).
    """
    NB, H, WC = x_ref.shape
    M = NB * H

    x_bf = x_ref[...]                                     # (NB, H, WC) bf16

    # ---- kh-im2col for conv1 (explicit row copies, lane-aligned slabs).
    # Halo rows are zeroed unconditionally every step: cheap (2*NB row stores)
    # and safe when the "parallel" grid axis is sharded across TensorCores.
    zrow = jnp.zeros((NB, 1, WC), jnp.bfloat16)
    col_ref[:, 0:1, 0:WC] = zrow                          # top halo, kh=0 slab
    col_ref[:, 1:H, 0:WC] = x_bf[:, 0:H - 1, :]           # kh=0: rows h-1
    col_ref[:, :, WC:2 * WC] = x_bf                       # kh=1: rows h
    col_ref[:, 0:H - 1, 2 * WC:3 * WC] = x_bf[:, 1:H, :]  # kh=2: rows h+1
    col_ref[:, H - 1:H, 2 * WC:3 * WC] = zrow             # bottom halo, kh=2

    # ---- conv1 as ONE (M, 3*WC) x (3*WC, WC) matmul + BN1 + ReLU ----------
    acc1 = jnp.dot(col_ref[...].reshape(M, 3 * WC), w1_ref[...],
                   preferred_element_type=jnp.float32)
    mid = jnp.maximum(acc1 * s1_ref[...] + b1_ref[...], 0.0)    # f32 epilogue
    mid_bf = mid.astype(jnp.bfloat16).reshape(NB, H, WC)

    # ---- kh-im2col for conv2 (halo rows in slabs 0/2 are still zero) ------
    col_ref[:, 1:H, 0:WC] = mid_bf[:, 0:H - 1, :]
    col_ref[:, :, WC:2 * WC] = mid_bf
    col_ref[:, 0:H - 1, 2 * WC:3 * WC] = mid_bf[:, 1:H, :]

    # ---- conv2 + BN2 + residual + ReLU -------------------------------------
    acc2 = jnp.dot(col_ref[...].reshape(M, 3 * WC), w2_ref[...],
                   preferred_element_type=jnp.float32)
    res = x_bf.reshape(M, WC).astype(jnp.float32)
    out = jnp.maximum(acc2 * s2_ref[...] + b2_ref[...] + res, 0.0)
    # TODO(synk): emit bf16 here when the next block consumes bf16 (halves
    # output HBM writeback); kept f32 to match the reference check.
    out_ref[...] = out.reshape(NB, H, WC).astype(out_ref.dtype)


def fold_bn(gamma, beta, running_mean, running_var, eps=1e-5):
    scale = gamma / jnp.sqrt(running_var + eps)
    bias = beta - running_mean * scale
    return scale, bias


def make_banded_weights(w, W, C):
    """PyTorch conv weight (Co, Ci, 3, 3) -> (3*W*C, W*C) kh-stacked banded matrix.

    Row block kh holds B[kh] with
      B[kh][w_in*C + ci, w_out*C + co] = Wt[kh, w_in - w_out + 1, ci, co]
    when 0 <= w_in - w_out + 1 <= 2, else 0 (width zero-padding = missing rows).
    Stacking the three taps along K lets one matmul do the whole 3x3 conv once
    the activations are laid out as a kh-im2col buffer.
    """
    wt = jnp.transpose(w, (2, 3, 1, 0))                 # (kh, kw, Ci, Co)
    w_in = jnp.arange(W)[:, None]
    w_out = jnp.arange(W)[None, :]
    dw = w_in - w_out + 1                               # (W, W)
    valid = (dw >= 0) & (dw <= 2)
    gathered = wt[:, jnp.clip(dw, 0, 2)]                # (3, W, W, Ci, Co)
    banded = jnp.where(valid[None, :, :, None, None], gathered, 0.0)
    banded = jnp.transpose(banded, (0, 1, 3, 2, 4))     # (3, w_in, Ci, w_out, Co)
    return banded.reshape(3 * W * C, W * C)


def prepare_block_params(params, W, C):
    """Done ONCE per model (hoisted out of the per-call path)."""
    (w1, g1, b1, rm1, rv1, w2, g2, b2, rm2, rv2) = params
    s1, bb1 = fold_bn(g1, b1, rm1, rv1)
    s2, bb2 = fold_bn(g2, b2, rm2, rv2)
    WC = W * C
    w1b = make_banded_weights(w1, W, C).astype(jnp.bfloat16)
    w2b = make_banded_weights(w2, W, C).astype(jnp.bfloat16)
    s1t = jnp.tile(s1, W).reshape(1, WC).astype(jnp.float32)
    b1t = jnp.tile(bb1, W).reshape(1, WC).astype(jnp.float32)
    s2t = jnp.tile(s2, W).reshape(1, WC).astype(jnp.float32)
    b2t = jnp.tile(bb2, W).reshape(1, WC).astype(jnp.float32)
    return (w1b, s1t, b1t, w2b, s2t, b2t)


def _pick_batch_tile(N, H, target_rows=256):
    """Largest divisor of N whose tile has at most ~target_rows matmul rows."""
    nb = 1
    for d in range(1, N + 1):
        if N % d == 0 and d * H <= target_rows:
            nb = d
    return nb


def basic_block_lane_dense(x2d, w1b, s1t, b1t, w2b, s2t, b2t):
    """x2d: (N, H, W*C) bf16 lane-dense activations. Returns (N, H, W*C) f32."""
    N, H, WC = x2d.shape
    NB = _pick_batch_tile(N, H)
    grid = (N // NB,)

    cost = pl.CostEstimate(
        flops=2 * 2 * N * H * (3 * WC) * WC,          # two kh-stacked matmuls
        transcendentals=0,
        bytes_accessed=(N * H * WC * 2)               # bf16 input
        + (N * H * WC * 4)                            # f32 output
        + 2 * (3 * WC * WC * 2)                       # two bf16 weight slabs
        + 4 * WC * 4)                                 # scale/bias

    return pl.pallas_call(
        basic_block_kernel,
        out_shape=jax.ShapeDtypeStruct((N, H, WC), jnp.float32),
        grid_spec=pltpu.PrefetchScalarGridSpec(
            num_scalar_prefetch=0,
            grid=grid,
            in_specs=[
                pl.BlockSpec((NB, H, WC), lambda t: (t, 0, 0)),
                pl.BlockSpec((3 * WC, WC), lambda t: (0, 0)),
                pl.BlockSpec((1, WC), lambda t: (0, 0)),
                pl.BlockSpec((1, WC), lambda t: (0, 0)),
                pl.BlockSpec((3 * WC, WC), lambda t: (0, 0)),
                pl.BlockSpec((1, WC), lambda t: (0, 0)),
                pl.BlockSpec((1, WC), lambda t: (0, 0)),
            ],
            out_specs=pl.BlockSpec((NB, H, WC), lambda t: (t, 0, 0)),
            scratch_shapes=[pltpu.VMEM((NB, H, 3 * WC), jnp.bfloat16)],
        ),
        compiler_params=pltpu.CompilerParams(
            dimension_semantics=("parallel",),
            vmem_limit_bytes=64 * 1024 * 1024),
        cost_estimate=cost,
    )(x2d, w1b, s1t, b1t, w2b, s2t, b2t)


def basic_block_nchw(x_nchw, prepared):
    """Layout shim for testing only: a real network keeps activations in the
    lane-dense (N, H, W*C) bf16 layout between blocks so these transposes
    (HBM round trips) disappear."""
    N, C, H, W = x_nchw.shape
    x2d = jnp.transpose(x_nchw, (0, 2, 3, 1)).reshape(N, H, W * C).astype(jnp.bfloat16)
    out = basic_block_lane_dense(x2d, *prepared)
    return jnp.transpose(out.reshape(N, H, W, C), (0, 3, 1, 2))


def basic_block_reference(x_nchw, params):
    """Pure-JAX reference with matching dtype policy (bf16 conv, f32 accum)."""
    (w1, g1, b1, rm1, rv1, w2, g2, b2, rm2, rv2) = params
    s1, bb1 = fold_bn(g1, b1, rm1, rv1)
    s2, bb2 = fold_bn(g2, b2, rm2, rv2)
    x = jnp.transpose(x_nchw, (0, 2, 3, 1)).astype(jnp.bfloat16)
    w1h = jnp.transpose(w1, (2, 3, 1, 0)).astype(jnp.bfloat16)
    w2h = jnp.transpose(w2, (2, 3, 1, 0)).astype(jnp.bfloat16)
    dn = ('NHWC', 'HWIO', 'NHWC')
    y = lax.conv_general_dilated(x, w1h, (1, 1), 'SAME', dimension_numbers=dn,
                                 preferred_element_type=jnp.float32)
    y = jnp.maximum(y * s1 + bb1, 0.0)
    y = lax.conv_general_dilated(y.astype(jnp.bfloat16), w2h, (1, 1), 'SAME',
                                 dimension_numbers=dn,
                                 preferred_element_type=jnp.float32)
    y = jnp.maximum(y * s2 + bb2 + x.astype(jnp.float32), 0.0)
    return jnp.transpose(y, (0, 3, 1, 2))


def make_params(key, planes):
    k1, k2 = jax.random.split(key)
    c = planes
    w1 = jax.random.normal(k1, (c, c, 3, 3), jnp.float32) * 0.1
    w2 = jax.random.normal(k2, (c, c, 3, 3), jnp.float32) * 0.1
    idx = jnp.arange(c, dtype=jnp.float32)
    g1 = 1.0 + 0.10 * idx
    b1 = 0.05 * idx - 0.1
    rm1 = 0.01 * idx
    rv1 = 1.0 + 0.02 * idx
    g2 = 1.0 - 0.03 * idx
    b2 = -0.02 * idx + 0.05
    rm2 = -0.01 * idx
    rv2 = 1.0 + 0.05 * idx
    return (w1, g1, b1, rm1, rv1, w2, g2, b2, rm2, rv2)


if __name__ == "__main__":
    # BasicBlock with stride=1, downsample=None => inplanes == planes.
    N, C, H, W = 2, 8, 16, 16          # W*C == 128 -> fully lane-dense
    key = jax.random.PRNGKey(0)
    kx, kp = jax.random.split(key)
    x = jax.random.normal(kx, (N, C, H, W), jnp.float32)
    params = make_params(kp, C)

    prepared = prepare_block_params(params, W, C)   # hoisted: once per model
    fwd = jax.jit(basic_block_nchw)
    out = jax.block_until_ready(fwd(x, prepared))

    ref = basic_block_reference(x, params)
    assert out.shape == (N, C, H, W)
    max_err = float(jnp.max(jnp.abs(out - ref)))
    assert jnp.allclose(out, ref, rtol=1e-2, atol=1e-2), max_err

    print("KERNEL_OK")
</pallas_src>

<mosaic_0001>
module attributes {stable_mosaic.version = 11 : i64} {
  func.func @basic_block_kernel(%arg0: i32, %arg1: memref<2x16x128xbf16, #tpu.memory_space<vmem>>, %arg2: memref<384x128xbf16, #tpu.memory_space<vmem>>, %arg3: memref<1x128xf32, #tpu.memory_space<vmem>>, %arg4: memref<1x128xf32, #tpu.memory_space<vmem>>, %arg5: memref<384x128xbf16, #tpu.memory_space<vmem>>, %arg6: memref<1x128xf32, #tpu.memory_space<vmem>>, %arg7: memref<1x128xf32, #tpu.memory_space<vmem>>, %arg8: memref<2x16x128xf32, #tpu.memory_space<vmem>>, %arg9: memref<2x16x384xbf16, #tpu.memory_space<vmem>>) attributes {dimension_semantics = [#tpu.dimension_semantics<parallel>], iteration_bounds = array<i64: 1>, scalar_prefetch = 0 : i64, scratch_operands = 1 : i64, tpu.core_type = #tpu.core_type<tc>, window_params = [{transform_indices = @transform_0, window_bounds = array<i64: 2, 16, 128>}, {pipeline_mode = #tpu.pipeline_mode<synchronous>, transform_indices = @transform_1, window_bounds = array<i64: 384, 128>}, {pipeline_mode = #tpu.pipeline_mode<synchronous>, transform_indices = @transform_2, window_bounds = array<i64: 1, 128>}, {pipeline_mode = #tpu.pipeline_mode<synchronous>, transform_indices = @transform_3, window_bounds = array<i64: 1, 128>}, {pipeline_mode = #tpu.pipeline_mode<synchronous>, transform_indices = @transform_4, window_bounds = array<i64: 384, 128>}, {pipeline_mode = #tpu.pipeline_mode<synchronous>, transform_indices = @transform_5, window_bounds = array<i64: 1, 128>}, {pipeline_mode = #tpu.pipeline_mode<synchronous>, transform_indices = @transform_6, window_bounds = array<i64: 1, 128>}, {transform_indices = @transform_7, window_bounds = array<i64: 2, 16, 128>}]} {
    %c0 = arith.constant 0 : index
    %c0_0 = arith.constant 0 : index
    %c0_1 = arith.constant 0 : index
    %0 = vector.load %arg1[%c0, %c0_0, %c0_1] : memref<2x16x128xbf16, #tpu.memory_space<vmem>>, vector<2x16x128xbf16>
    %cst = arith.constant 0.000000e+00 : bf16
    %1 = vector.broadcast %cst : bf16 to vector<2x1x128xbf16>
    %c0_2 = arith.constant 0 : index
    %c0_3 = arith.constant 0 : index
    %c0_4 = arith.constant 0 : index
    %2 = vector.load %arg9[%c0_2, %c0_3, %c0_4] : memref<2x16x384xbf16, #tpu.memory_space<vmem>>, vector<2x1x128xbf16>
    tpu.vector_store %arg9[%c0_2, %c0_3, %c0_4], %1 {strides = array<i32>} : memref<2x16x384xbf16, #tpu.memory_space<vmem>>, vector<2x1x128xbf16>,
    %3 = vector.extract_strided_slice %0 {offsets = [0, 0, 0], sizes = [2, 15, 128], strides = [1, 1, 1]} : vector<2x16x128xbf16> to vector<2x15x128xbf16>
    %c0_5 = arith.constant 0 : index
    %c1 = arith.constant 1 : index
    %c0_6 = arith.constant 0 : index
    %4 = vector.load %arg9[%c0_5, %c1, %c0_6] : memref<2x16x384xbf16, #tpu.memory_space<vmem>>, vector<2x15x128xbf16>
    tpu.vector_store %arg9[%c0_5, %c1, %c0_6], %3 {strides = array<i32>} : memref<2x16x384xbf16, #tpu.memory_space<vmem>>, vector<2x15x128xbf16>,
    %c0_7 = arith.constant 0 : index
    %c0_8 = arith.constant 0 : index
    %c128 = arith.constant 128 : index
    %5 = vector.load %arg9[%c0_7, %c0_8, %c128] : memref<2x16x384xbf16, #tpu.memory_space<vmem>>, vector<2x16x128xbf16>
    tpu.vector_store %arg9[%c0_7, %c0_8, %c128], %0 {strides = array<i32>} : memref<2x16x384xbf16, #tpu.memory_space<vmem>>, vector<2x16x128xbf16>,
    %6 = vector.extract_strided_slice %0 {offsets = [0, 1, 0], sizes = [2, 15, 128], strides = [1, 1, 1]} : vector<2x16x128xbf16> to vector<2x15x128xbf16>
    %c0_9 = arith.constant 0 : index
    %c0_10 = arith.constant 0 : index
    %c256 = arith.constant 256 : index
    %7 = vector.load %arg9[%c0_9, %c0_10, %c256] : memref<2x16x384xbf16, #tpu.memory_space<vmem>>, vector<2x15x128xbf16>
    tpu.vector_store %arg9[%c0_9, %c0_10, %c256], %6 {strides = array<i32>} : memref<2x16x384xbf16, #tpu.memory_space<vmem>>, vector<2x15x128xbf16>,
    %c0_11 = arith.constant 0 : index
    %c15 = arith.constant 15 : index
    %c256_12 = arith.constant 256 : index
    %8 = vector.load %arg9[%c0_11, %c15, %c256_12] : memref<2x16x384xbf16, #tpu.memory_space<vmem>>, vector<2x1x128xbf16>
    tpu.vector_store %arg9[%c0_11, %c15, %c256_12], %1 {strides = array<i32>} : memref<2x16x384xbf16, #tpu.memory_space<vmem>>, vector<2x1x128xbf16>,
    %c0_13 = arith.constant 0 : index
    %c0_14 = arith.constant 0 : index
    %c0_15 = arith.constant 0 : index
    %9 = vector.load %arg9[%c0_13, %c0_14, %c0_15] : memref<2x16x384xbf16, #tpu.memory_space<vmem>>, vector<2x16x384xbf16>
    %10 = vector.shape_cast %9 : vector<2x16x384xbf16> to vector<32x384xbf16>
    %c0_16 = arith.constant 0 : index
    %c0_17 = arith.constant 0 : index
    %11 = vector.load %arg2[%c0_16, %c0_17] : memref<384x128xbf16, #tpu.memory_space<vmem>>, vector<384x128xbf16>
    %cst_18 = arith.constant dense<0.000000e+00> : vector<32x128xf32>
    %12 = tpu.matmul %10, %11, %cst_18 {dimension_numbers = #tpu.dot_dimension_numbers<[1], [0], [0], [1], [0, 0, 1, 1], [], []>} : vector<32x384xbf16>, vector<384x128xbf16>, vector<32x128xf32> -> vector<32x128xf32>
    %c0_19 = arith.constant 0 : index
    %c0_20 = arith.constant 0 : index
    %13 = vector.load %arg3[%c0_19, %c0_20] : memref<1x128xf32, #tpu.memory_space<vmem>>, vector<1x128xf32>
    %14 = vector.broadcast %13 : vector<1x128xf32> to vector<32x128xf32>
    %15 = arith.mulf %12, %14 : vector<32x128xf32>
    %c0_21 = arith.constant 0 : index
    %c0_22 = arith.constant 0 : index
    %16 = vector.load %arg4[%c0_21, %c0_22] : memref<1x128xf32, #tpu.memory_space<vmem>>, vector<1x128xf32>
    %17 = vector.broadcast %16 : vector<1x128xf32> to vector<32x128xf32>
    %18 = arith.addf %15, %17 : vector<32x128xf32>
    %cst_23 = arith.constant 0.000000e+00 : f32
    %19 = vector.broadcast %cst_23 : f32 to vector<32x128xf32>
    %20 = arith.maximumf %18, %19 : vector<32x128xf32>
    %21 = arith.truncf %20 : vector<32x128xf32> to vector<32x128xbf16>
    %22 = vector.shape_cast %21 : vector<32x128xbf16> to vector<2x16x128xbf16>
    %23 = vector.extract_strided_slice %22 {offsets = [0, 0, 0], sizes = [2, 15, 128], strides = [1, 1, 1]} : vector<2x16x128xbf16> to vector<2x15x128xbf16>
    %c0_24 = arith.constant 0 : index
    %c1_25 = arith.constant 1 : index
    %c0_26 = arith.constant 0 : index
    %24 = vector.load %arg9[%c0_24, %c1_25, %c0_26] : memref<2x16x384xbf16, #tpu.memory_space<vmem>>, vector<2x15x128xbf16>
    tpu.vector_store %arg9[%c0_24, %c1_25, %c0_26], %23 {strides = array<i32>} : memref<2x16x384xbf16, #tpu.memory_space<vmem>>, vector<2x15x128xbf16>,
    %c0_27 = arith.constant 0 : index
    %c0_28 = arith.constant 0 : index
    %c128_29 = arith.constant 128 : index
    %25 = vector.load %arg9[%c0_27, %c0_28, %c128_29] : memref<2x16x384xbf16, #tpu.memory_space<vmem>>, vector<2x16x128xbf16>
    tpu.vector_store %arg9[%c0_27, %c0_28, %c128_29], %22 {strides = array<i32>} : memref<2x16x384xbf16, #tpu.memory_space<vmem>>, vector<2x16x128xbf16>,
    %26 = vector.extract_strided_slice %22 {offsets = [0, 1, 0], sizes = [2, 15, 128], strides = [1, 1, 1]} : vector<2x16x128xbf16> to vector<2x15x128xbf16>
    %c0_30 = arith.constant 0 : index
    %c0_31 = arith.constant 0 : index
    %c256_32 = arith.constant 256 : index
    %27 = vector.load %arg9[%c0_30, %c0_31, %c256_32] : memref<2x16x384xbf16, #tpu.memory_space<vmem>>, vector<2x15x128xbf16>
    tpu.vector_store %arg9[%c0_30, %c0_31, %c256_32], %26 {strides = array<i32>} : memref<2x16x384xbf16, #tpu.memory_space<vmem>>, vector<2x15x128xbf16>,
    %c0_33 = arith.constant 0 : index
    %c0_34 = arith.constant 0 : index
    %c0_35 = arith.constant 0 : index
    %28 = vector.load %arg9[%c0_33, %c0_34, %c0_35] : memref<2x16x384xbf16, #tpu.memory_space<vmem>>, vector<2x16x384xbf16>
    %29 = vector.shape_cast %28 : vector<2x16x384xbf16> to vector<32x384xbf16>
    %c0_36 = arith.constant 0 : index
    %c0_37 = arith.constant 0 : index
    %30 = vector.load %arg5[%c0_36, %c0_37] : memref<384x128xbf16, #tpu.memory_space<vmem>>, vector<384x128xbf16>
    %cst_38 = arith.constant dense<0.000000e+00> : vector<32x128xf32>
    %31 = tpu.matmul %29, %30, %cst_38 {dimension_numbers = #tpu.dot_dimension_numbers<[1], [0], [0], [1], [0, 0, 1, 1], [], []>} : vector<32x384xbf16>, vector<384x128xbf16>, vector<32x128xf32> -> vector<32x128xf32>
    %32 = vector.shape_cast %0 : vector<2x16x128xbf16> to vector<32x128xbf16>
    %33 = arith.extf %32 : vector<32x128xbf16> to vector<32x128xf32>
    %c0_39 = arith.constant 0 : index
    %c0_40 = arith.constant 0 : index
    %34 = vector.load %arg6[%c0_39, %c0_40] : memref<1x128xf32, #tpu.memory_space<vmem>>, vector<1x128xf32>
    %35 = vector.broadcast %34 : vector<1x128xf32> to vector<32x128xf32>
    %36 = arith.mulf %31, %35 : vector<32x128xf32>
    %c0_41 = arith.constant 0 : index
    %c0_42 = arith.constant 0 : index
    %37 = vector.load %arg7[%c0_41, %c0_42] : memref<1x128xf32, #tpu.memory_space<vmem>>, vector<1x128xf32>
    %38 = vector.broadcast %37 : vector<1x128xf32> to vector<32x128xf32>
    %39 = arith.addf %36, %38 : vector<32x128xf32>
    %40 = arith.addf %39, %33 : vector<32x128xf32>
    %cst_43 = arith.constant 0.000000e+00 : f32
    %41 = vector.broadcast %cst_43 : f32 to vector<32x128xf32>
    %42 = arith.maximumf %40, %41 : vector<32x128xf32>
    %43 = vector.shape_cast %42 : vector<32x128xf32> to vector<2x16x128xf32>
    %c0_44 = arith.constant 0 : index
    %c0_45 = arith.constant 0 : index
    %c0_46 = arith.constant 0 : index
    %44 = vector.load %arg8[%c0_44, %c0_45, %c0_46] : memref<2x16x128xf32, #tpu.memory_space<vmem>>, vector<2x16x128xf32>
    tpu.vector_store %arg8[%c0_44, %c0_45, %c0_46], %43 {strides = array<i32>} : memref<2x16x128xf32, #tpu.memory_space<vmem>>, vector<2x16x128xf32>,
    return
  }
  func.func @transform_0(%arg0: i32) -> (i32, i32, i32) {
    %c0_i32 = arith.constant 0 : i32
    %c0_i32_0 = arith.constant 0 : i32
    %c0_i32_1 = arith.constant 0 : i32
    return %arg0, %c0_i32, %c0_i32_0 : i32, i32, i32
  }
  func.func @transform_1(%arg0: i32) -> (i32, i32) {
    %c0_i32 = arith.constant 0 : i32
    %c0_i32_0 = arith.constant 0 : i32
    %c0_i32_1 = arith.constant 0 : i32
    return %c0_i32, %c0_i32_0 : i32, i32
  }
  func.func @transform_2(%arg0: i32) -> (i32, i32) {
    %c0_i32 = arith.constant 0 : i32
    %c0_i32_0 = arith.constant 0 : i32
    %c0_i32_1 = arith.constant 0 : i32
    return %c0_i32, %c0_i32_0 : i32, i32
  }
  func.func @transform_3(%arg0: i32) -> (i32, i32) {
    %c0_i32 = arith.constant 0 : i32
    %c0_i32_0 = arith.constant 0 : i32
    %c0_i32_1 = arith.constant 0 : i32
    return %c0_i32, %c0_i32_0 : i32, i32
  }
  func.func @transform_4(%arg0: i32) -> (i32, i32) {
    %c0_i32 = arith.constant 0 : i32
    %c0_i32_0 = arith.constant 0 : i32
    %c0_i32_1 = arith.constant 0 : i32
    return %c0_i32, %c0_i32_0 : i32, i32
  }
  func.func @transform_5(%arg0: i32) -> (i32, i32) {
    %c0_i32 = arith.constant 0 : i32
    %c0_i32_0 = arith.constant 0 : i32
    %c0_i32_1 = arith.constant 0 : i32
    return %c0_i32, %c0_i32_0 : i32, i32
  }
  func.func @transform_6(%arg0: i32) -> (i32, i32) {
    %c0_i32 = arith.constant 0 : i32
    %c0_i32_0 = arith.constant 0 : i32
    %c0_i32_1 = arith.constant 0 : i32
    return %c0_i32, %c0_i32_0 : i32, i32
  }
  func.func @transform_7(%arg0: i32) -> (i32, i32, i32) {
    %c0_i32 = arith.constant 0 : i32
    %c0_i32_0 = arith.constant 0 : i32
    %c0_i32_1 = arith.constant 0 : i32
    return %arg0, %c0_i32, %c0_i32_0 : i32, i32, i32
  }
}

</mosaic_0001>

<llo_original>
// kernel: basic_block_nchw.1
$region0: #{basic_block_nchw.1}
  #allocation0 [shape = 'u32[]', space=smem, size = 0x4, offset = 0x4, fixed_abs, tag = 'smem constant byte address 0x4 - core index']
  #allocation1 [shape = 'u32[144,128]{1,0:T(1,128)}', space=vmem, size = 0x12000, scoped, tag = 'internal scratch']
  #allocation2 [shape = 'bf16[2,16,384]{2,1,0:T(16,128)(2,1)}', space=vmem, size = 0x6000, scoped, tag = 'scratch operand']
  %s0 = inlined_call_operand.hbm [shape: bf16[2,16,128], index: 0, kind: input, shape index: {}]
  %s1 = inlined_call_operand.hbm [shape: bf16[384,128], index: 1, kind: input, shape index: {}]
  %s2 = inlined_call_operand.hbm [shape: f32[1,128], index: 2, kind: input, shape index: {}]
  %s3 = inlined_call_operand.hbm [shape: f32[1,128], index: 3, kind: input, shape index: {}]
  %s4 = inlined_call_operand.hbm [shape: bf16[384,128], index: 4, kind: input, shape index: {}]
  %s5 = inlined_call_operand.hbm [shape: f32[1,128], index: 5, kind: input, shape index: {}]
  %s6 = inlined_call_operand.hbm [shape: f32[1,128], index: 6, kind: input, shape index: {}]
  %s7 = inlined_call_operand.hbm [shape: f32[2,16,128], index: 7, kind: output, shape index: {}]
  %s8 = sld [smem:[#allocation0]]
  $region66: #{basic_block_nchw.1} parent=0
    _
  %s10 = ssub.s32 1, %s8
  %s11 = scalar_select 0, %s10, %s8
  $region1: #{basic_block_nchw.1} parent=0
    #allocation3 [shape = 'u8[8192]{0}', space=vmem, size = 0x2000, scoped, tag = 'input window, operand 0, single buffered']
    #allocation4 [shape = 's32[1]{0}', space=sflag, size = 0x4, scoped, tag = 'scoped memory for basic_block_nchw.1']
    #allocation5 [shape = 's32[1]{0}', space=sflag, size = 0x4, scoped, tag = 'scoped memory for basic_block_nchw.1']
    #allocation6 [shape = 'u8[98304]{0}', space=vmem, size = 0x18000, scoped, tag = 'input window, operand 1, single buffered']
    #allocation7 [shape = 's32[1]{0}', space=sflag, size = 0x4, scoped, tag = 'scoped memory for basic_block_nchw.1']
    #allocation8 [shape = 'u8[512]{0}', space=vmem, size = 0x400, scoped, tag = 'input window, operand 2, single buffered']
    #allocation9 [shape = 'u8[512]{0}', space=vmem, size = 0x400, scoped, tag = 'input window, operand 3, single buffered']
    #allocation10 [shape = 's32[1]{0}', space=sflag, size = 0x4, scoped, tag = 'scoped memory for basic_block_nchw.1']
    #allocation11 [shape = 'u8[98304]{0}', space=vmem, size = 0x18000, scoped, tag = 'input window, operand 4, single buffered']
    #allocation12 [shape = 'u8[512]{0}', space=vmem, size = 0x400, scoped, tag = 'input window, operand 5, single buffered']
    #allocation13 [shape = 's32[1]{0}', space=sflag, size = 0x4, scoped, tag = 'scoped memory for basic_block_nchw.1']
    #allocation14 [shape = 'u8[512]{0}', space=vmem, size = 0x400, scoped, tag = 'input window, operand 6, single buffered']
    #allocation15 [shape = 'u8[16384]{0}', space=vmem, size = 0x4000, scoped, tag = 'output window, operand 0, single buffered']
    %12 = vsyncpa [#allocation4], 0
    %13 = vsyncpa [#allocation7], 0
    %14 = vsyncpa [#allocation10], 0
    %15 = vsyncpa [#allocation13], 0
    %16 = vsyncpa [#allocation5], 0
    // Predicated region
    $region2: #{basic_block_nchw.1} parent=1 // pred_check
      _
    $region3: #{basic_block_nchw.1} parent=1 // pred_check_branch
      %18 = sbr.rel (0) target = $region5
    $region4: #{basic_block_nchw.1} parent=1 // pred_region
      %s20 = ssub.s32 256, 256
      %21 = vsyncadd [#allocation4], %s20
      %s22 = sshll.u32 [#allocation3], 4
      %s23 = int_to_ptr.vmem [resolvable:$true] %s22
      %28 = dma.hbm_to_vmem [thread:$0]  %s0, 256, %s23, [#allocation4], 64, 64, 4
    $region5: #{basic_block_nchw.1} parent=1 // pred_fallthru
      _
    // Predicated region
    $region6: #{basic_block_nchw.1} parent=1 // pred_check
      _
    $region7: #{basic_block_nchw.1} parent=1 // pred_check_branch
      %30 = sbr.rel (0) target = $region9
    $region8: #{basic_block_nchw.1} parent=1 // pred_region
      %s32 = ssub.s32 3072, 3072
      %33 = vsyncadd [#allocation7], %s32
      %s34 = sshll.u32 [#allocation6], 4
      %s35 = int_to_ptr.vmem [resolvable:$true] %s34
      %40 = dma.hbm_to_vmem [thread:$0]  %s1, 3072, %s35, [#allocation7], 64, 64, 4
    $region9: #{basic_block_nchw.1} parent=1 // pred_fallthru
      _
    // Predicated region
    $region10: #{basic_block_nchw.1} parent=1 // pred_check
      _
    $region11: #{basic_block_nchw.1} parent=1 // pred_check_branch
      %42 = sbr.rel (0) target = $region13
    $region12: #{basic_block_nchw.1} parent=1 // pred_region
      %s44 = ssub.s32 16, 16
      %45 = vsyncadd [#allocation7], %s44
      %s47 = sshll.u32 [#allocation8], 4
      %s48 = int_to_ptr.vmem [resolvable:$true] %s47
      %50 = dma.hbm_to_vmem [thread:$0]  %s2, 16, %s48, [#allocation7]
    $region13: #{basic_block_nchw.1} parent=1 // pred_fallthru
      _
    // Predicated region
    $region14: #{basic_block_nchw.1} parent=1 // pred_check
      _
    $region15: #{basic_block_nchw.1} parent=1 // pred_check_branch
      %52 = sbr.rel (0) target = $region17
    $region16: #{basic_block_nchw.1} parent=1 // pred_region
      %s54 = ssub.s32 16, 16
      %55 = vsyncadd [#allocation10], %s54
      %s57 = sshll.u32 [#allocation9], 4
      %s58 = int_to_ptr.vmem [resolvable:$true] %s57
      %60 = dma.hbm_to_vmem [thread:$0]  %s3, 16, %s58, [#allocation10]
    $region17: #{basic_block_nchw.1} parent=1 // pred_fallthru
      _
    // Predicated region
    $region18: #{basic_block_nchw.1} parent=1 // pred_check
      _
    $region19: #{basic_block_nchw.1} parent=1 // pred_check_branch
      %62 = sbr.rel (0) target = $region21
    $region20: #{basic_block_nchw.1} parent=1 // pred_region
      %s64 = ssub.s32 3072, 3072
      %65 = vsyncadd [#allocation10], %s64
      %s66 = sshll.u32 [#allocation11], 4
      %s67 = int_to_ptr.vmem [resolvable:$true] %s66
      %72 = dma.hbm_to_vmem [thread:$0]  %s4, 3072, %s67, [#allocation10], 64, 64, 4
    $region21: #{basic_block_nchw.1} parent=1 // pred_fallthru
      _
    // Predicated region
    $region22: #{basic_block_nchw.1} parent=1 // pred_check
      _
    $region23: #{basic_block_nchw.1} parent=1 // pred_check_branch
      %74 = sbr.rel (0) target = $region25
    $region24: #{basic_block_nchw.1} parent=1 // pred_region
      %s76 = ssub.s32 16, 16
      %77 = vsyncadd [#allocation13], %s76
      %s79 = sshll.u32 [#allocation12], 4
      %s80 = int_to_ptr.vmem [resolvable:$true] %s79
      %82 = dma.hbm_to_vmem [thread:$0]  %s5, 16, %s80, [#allocation13]
    $region25: #{basic_block_nchw.1} parent=1 // pred_fallthru
      _
    // Predicated region
    $region26: #{basic_block_nchw.1} parent=1 // pred_check
      _
    $region27: #{basic_block_nchw.1} parent=1 // pred_check_branch
      %84 = sbr.rel (0) target = $region29
    $region28: #{basic_block_nchw.1} parent=1 // pred_region
      %s86 = ssub.s32 16, 16
      %87 = vsyncadd [#allocation13], %s86
      %s89 = sshll.u32 [#allocation14], 4
      %s90 = int_to_ptr.vmem [resolvable:$true] %s89
      %92 = dma.hbm_to_vmem [thread:$0]  %s6, 16, %s90, [#allocation13]
    $region29: #{basic_block_nchw.1} parent=1 // pred_fallthru
      _
    // Predicated region
    $region30: #{basic_block_nchw.1} parent=1 // pred_check
      _
    $region31: #{basic_block_nchw.1} parent=1 // pred_check_branch
      %94 = sbr.rel (0) target = $region33
    $region32: #{basic_block_nchw.1} parent=1 // pred_region
      %95 = dma.done [#allocation4], 256
    $region33: #{basic_block_nchw.1} parent=1 // pred_fallthru
      _
    // Predicated region
    $region34: #{basic_block_nchw.1} parent=1 // pred_check
      _
    $region35: #{basic_block_nchw.1} parent=1 // pred_check_branch
      %97 = sbr.rel (0) target = $region37
    $region36: #{basic_block_nchw.1} parent=1 // pred_region
      %98 = dma.done [#allocation7], 3072
    $region37: #{basic_block_nchw.1} parent=1 // pred_fallthru
      _
    // Predicated region
    $region38: #{basic_block_nchw.1} parent=1 // pred_check
      _
    $region39: #{basic_block_nchw.1} parent=1 // pred_check_branch
      %100 = sbr.rel (0) target = $region41
    $region40: #{basic_block_nchw.1} parent=1 // pred_region
      %101 = dma.done [#allocation7], 16
    $region41: #{basic_block_nchw.1} parent=1 // pred_fallthru
      _
    // Predicated region
    $region42: #{basic_block_nchw.1} parent=1 // pred_check
      _
    $region43: #{basic_block_nchw.1} parent=1 // pred_check_branch
      %103 = sbr.rel (0) target = $region45
    $region44: #{basic_block_nchw.1} parent=1 // pred_region
      %104 = dma.done [#allocation10], 16
    $region45: #{basic_block_nchw.1} parent=1 // pred_fallthru
      _
    // Predicated region
    $region46: #{basic_block_nchw.1} parent=1 // pred_check
      _
    $region47: #{basic_block_nchw.1} parent=1 // pred_check_branch
      %106 = sbr.rel (0) target = $region49
    $region48: #{basic_block_nchw.1} parent=1 // pred_region
      %107 = dma.done [#allocation10], 3072
    $region49: #{basic_block_nchw.1} parent=1 // pred_fallthru
      _
    // Predicated region
    $region50: #{basic_block_nchw.1} parent=1 // pred_check
      _
    $region51: #{basic_block_nchw.1} parent=1 // pred_check_branch
      %109 = sbr.rel (0) target = $region53
    $region52: #{basic_block_nchw.1} parent=1 // pred_region
      %110 = dma.done [#allocation13], 16
    $region53: #{basic_block_nchw.1} parent=1 // pred_fallthru
      _
    // Predicated region
    $region54: #{basic_block_nchw.1} parent=1 // pred_check
      _
    $region55: #{basic_block_nchw.1} parent=1 // pred_check_branch
      %112 = sbr.rel (0) target = $region57
    $region56: #{basic_block_nchw.1} parent=1 // pred_region
      %113 = dma.done [#allocation13], 16
    $region57: #{basic_block_nchw.1} parent=1 // pred_fallthru
      _
    %v115 = vld [vmem:[#allocation3] sm:$0xf]
    %v116 = vld [vmem:[#allocation3 + $0x4] sm:$0xf]
    %v117 = vld [vmem:[#allocation3 + $0x8] sm:$0xf]
    %v118 = vld [vmem:[#allocation3 + $0xc] sm:$0xf]
    %vm119 = vcmask 1040384
    %vm120 = vsmask.f32 256
    %vm121 = vmand %vm119, %vm120
    %v122 = vld [vmem:[#allocation2] sm:$0x1]
    %v123 = vsel %vm121, 0, %v122
    %124 = vst [vmem:[#allocation2] sm:$0x1] %v123
    %v125 = vld [vmem:[#allocation2 + $0x18] sm:$0x1]
    %v126 = vsel %vm121, 0, %v125
    %127 = vst [vmem:[#allocation2 + $0x18] sm:$0x1] %v126
    %v132 = vunpack.c.l.b16 %v115
    %v133 = vunpack.c.l.b16 %v116
    %v134 = vunpack.c.l.b16 %v117
    %v135 = vunpack.c.l.b16 %v118
    %v136 = vpack.c.b16 %v133, %v132
    %v137 = vpack.c.b16 %v135, %v134
    %v139 = vshrl.u32 %v136, 16
    %v141 = vrot.slane %v139, 7
    %v142 = vshll.u32 %v136, 16
    %v144 = vor.u32 %v141, %v142
    %v146 = vshrl.u32 %v137, 16
    %v148 = vrot.slane %v146, 7
    %v149 = vshll.u32 %v137, 16
    %v151 = vor.u32 %v148, %v149
    %vm154 = vcmask 1047552
    %vm155 = vsmask.f32 7938
    %vm156 = vmand %vm154, %vm155
    %v157 = vld [vmem:[#allocation2] sm:$0xff]
    %v158 = vsel %vm156, %v144, %v157
    %159 = vst [vmem:[#allocation2] sm:$0xff] %v158
    %v160 = vld [vmem:[#allocation2 + $0x18] sm:$0xff]
    %v161 = vsel %vm156, %v151, %v160
    %162 = vst [vmem:[#allocation2 + $0x18] sm:$0xff] %v161
    %165 = vst [vmem:[#allocation2 + $0x8] sm:$0xff] %v136
    %166 = vst [vmem:[#allocation2 + $0x20] sm:$0xff] %v137
    %v167 = vrot.slane %v142, 1
    %v168 = vor.u32 %v139, %v167
    %v169 = vrot.slane %v149, 1
    %v170 = vor.u32 %v146, %v169
    %vm173 = vsmask.f32 7424
    %vm174 = vmand %vm154, %vm173
    %v175 = vld [vmem:[#allocation2 + $0x10] sm:$0xff]
    %v176 = vsel %vm174, %v168, %v175
    %177 = vst [vmem:[#allocation2 + $0x10] sm:$0xff] %v176
    %v178 = vld [vmem:[#allocation2 + $0x28] sm:$0xff]
    %v179 = vsel %vm174, %v170, %v178
    %180 = vst [vmem:[#allocation2 + $0x28] sm:$0xff] %v179
    %vm181 = vcmask 1047559
    %vm182 = vsmask.f32 7966
    %vm183 = vmand %vm181, %vm182
    %v184 = vld [vmem:[#allocation2 + $0x10] sm:$0x80]
    %v185 = vsel %vm183, 0, %v184
    %186 = vst [vmem:[#allocation2 + $0x10] sm:$0x80] %v185
    %v187 = vld [vmem:[#allocation2 + $0x28] sm:$0x80]
    %v188 = vsel %vm183, 0, %v187
    %189 = vst [vmem:[#allocation2 + $0x28] sm:$0x80] %v188
    %v190 = vld [vmem:[#allocation2] sm:$0xff]
    %v191 = vld [vmem:[#allocation2 + $0x8] sm:$0xff]
    %v192 = vld [vmem:[#allocation2 + $0x10] sm:$0xff]
    %v193 = vld [vmem:[#allocation2 + $0x18] sm:$0xff]
    %v194 = vld [vmem:[#allocation2 + $0x20] sm:$0xff]
    %v195 = vld [vmem:[#allocation2 + $0x28] sm:$0xff]
    %v196 = vld [vmem:[#allocation6] sm:$0xf]
    %v197 = vld [vmem:[#allocation6 + $0x4] sm:$0xf]
    %v198 = vld [vmem:[#allocation6 + $0x8] sm:$0xf]
    %v199 = vld [vmem:[#allocation6 + $0xc] sm:$0xf]
    %v200 = vld [vmem:[#allocation6 + $0x10] sm:$0xf]
    %v201 = vld [vmem:[#allocation6 + $0x14] sm:$0xf]
    %v202 = vld [vmem:[#allocation6 + $0x18] sm:$0xf]
    %v203 = vld [vmem:[#allocation6 + $0x1c] sm:$0xf]
    %v204 = vld [vmem:[#allocation6 + $0x20] sm:$0xf]
    %v205 = vld [vmem:[#allocation6 + $0x24] sm:$0xf]
    %v206 = vld [vmem:[#allocation6 + $0x28] sm:$0xf]
    %v207 = vld [vmem:[#allocation6 + $0x2c] sm:$0xf]
    %v208 = vld [vmem:[#allocation6 + $0x30] sm:$0xf]
    %v209 = vld [vmem:[#allocation6 + $0x34] sm:$0xf]
    %v210 = vld [vmem:[#allocation6 + $0x38] sm:$0xf]
    %v211 = vld [vmem:[#allocation6 + $0x3c] sm:$0xf]
    %v212 = vld [vmem:[#allocation6 + $0x40] sm:$0xf]
    %v213 = vld [vmem:[#allocation6 + $0x44] sm:$0xf]
    %v214 = vld [vmem:[#allocation6 + $0x48] sm:$0xf]
    %v215 = vld [vmem:[#allocation6 + $0x4c] sm:$0xf]
    %v216 = vld [vmem:[#allocation6 + $0x50] sm:$0xf]
    %v217 = vld [vmem:[#allocation6 + $0x54] sm:$0xf]
    %v218 = vld [vmem:[#allocation6 + $0x58] sm:$0xf]
    %v219 = vld [vmem:[#allocation6 + $0x5c] sm:$0xf]
    %v220 = vld [vmem:[#allocation6 + $0x60] sm:$0xf]
    %v221 = vld [vmem:[#allocation6 + $0x64] sm:$0xf]
    %v222 = vld [vmem:[#allocation6 + $0x68] sm:$0xf]
    %v223 = vld [vmem:[#allocation6 + $0x6c] sm:$0xf]
    %v224 = vld [vmem:[#allocation6 + $0x70] sm:$0xf]
    %v225 = vld [vmem:[#allocation6 + $0x74] sm:$0xf]
    %v226 = vld [vmem:[#allocation6 + $0x78] sm:$0xf]
    %v227 = vld [vmem:[#allocation6 + $0x7c] sm:$0xf]
    %v228 = vld [vmem:[#allocation6 + $0x80] sm:$0xf]
    %v229 = vld [vmem:[#allocation6 + $0x84] sm:$0xf]
    %v230 = vld [vmem:[#allocation6 + $0x88] sm:$0xf]
    %v231 = vld [vmem:[#allocation6 + $0x8c] sm:$0xf]
    %v232 = vld [vmem:[#allocation6 + $0x90] sm:$0xf]
    %v233 = vld [vmem:[#allocation6 + $0x94] sm:$0xf]
    %v234 = vld [vmem:[#allocation6 + $0x98] sm:$0xf]
    %v235 = vld [vmem:[#allocation6 + $0x9c] sm:$0xf]
    %v236 = vld [vmem:[#allocation6 + $0xa0] sm:$0xf]
    %v237 = vld [vmem:[#allocation6 + $0xa4] sm:$0xf]
    %v238 = vld [vmem:[#allocation6 + $0xa8] sm:$0xf]
    %v239 = vld [vmem:[#allocation6 + $0xac] sm:$0xf]
    %v240 = vld [vmem:[#allocation6 + $0xb0] sm:$0xf]
    %v241 = vld [vmem:[#allocation6 + $0xb4] sm:$0xf]
    %v242 = vld [vmem:[#allocation6 + $0xb8] sm:$0xf]
    %v243 = vld [vmem:[#allocation6 + $0xbc] sm:$0xf]
    %v292 = vunpack.c.l.b16 %v196
    %v293 = vunpack.c.l.b16 %v197
    %v294 = vunpack.c.l.b16 %v198
    %v295 = vunpack.c.l.b16 %v199
    %v296 = vunpack.c.l.b16 %v200
    %v297 = vunpack.c.l.b16 %v201
    %v298 = vunpack.c.l.b16 %v202
    %v299 = vunpack.c.l.b16 %v203
    %v300 = vunpack.c.l.b16 %v204
    %v301 = vunpack.c.l.b16 %v205
    %v302 = vunpack.c.l.b16 %v206
    %v303 = vunpack.c.l.b16 %v207
    %v304 = vunpack.c.l.b16 %v208
    %v305 = vunpack.c.l.b16 %v209
    %v306 = vunpack.c.l.b16 %v210
    %v307 = vunpack.c.l.b16 %v211
    %v308 = vunpack.c.l.b16 %v212
    %v309 = vunpack.c.l.b16 %v213
    %v310 = vunpack.c.l.b16 %v214
    %v311 = vunpack.c.l.b16 %v215
    %v312 = vunpack.c.l.b16 %v216
    %v313 = vunpack.c.l.b16 %v217
    %v314 = vunpack.c.l.b16 %v218
    %v315 = vunpack.c.l.b16 %v219
    %v316 = vunpack.c.l.b16 %v220
    %v317 = vunpack.c.l.b16 %v221
    %v318 = vunpack.c.l.b16 %v222
    %v319 = vunpack.c.l.b16 %v223
    %v320 = vunpack.c.l.b16 %v224
    %v321 = vunpack.c.l.b16 %v225
    %v322 = vunpack.c.l.b16 %v226
    %v323 = vunpack.c.l.b16 %v227
    %v324 = vunpack.c.l.b16 %v228
    %v325 = vunpack.c.l.b16 %v229
    %v326 = vunpack.c.l.b16 %v230
    %v327 = vunpack.c.l.b16 %v231
    %v328 = vunpack.c.l.b16 %v232
    %v329 = vunpack.c.l.b16 %v233
    %v330 = vunpack.c.l.b16 %v234
    %v331 = vunpack.c.l.b16 %v235
    %v332 = vunpack.c.l.b16 %v236
    %v333 = vunpack.c.l.b16 %v237
    %v334 = vunpack.c.l.b16 %v238
    %v335 = vunpack.c.l.b16 %v239
    %v336 = vunpack.c.l.b16 %v240
    %v337 = vunpack.c.l.b16 %v241
    %v338 = vunpack.c.l.b16 %v242
    %v339 = vunpack.c.l.b16 %v243
    %v340 = vpack.c.b16 %v293, %v292
    %v341 = vpack.c.b16 %v295, %v294
    %v342 = vpack.c.b16 %v297, %v296
    %v343 = vpack.c.b16 %v299, %v298
    %v344 = vpack.c.b16 %v301, %v300
    %v345 = vpack.c.b16 %v303, %v302
    %v346 = vpack.c.b16 %v305, %v304
    %v347 = vpack.c.b16 %v307, %v306
    %v348 = vpack.c.b16 %v309, %v308
    %v349 = vpack.c.b16 %v311, %v310
    %v350 = vpack.c.b16 %v313, %v312
    %v351 = vpack.c.b16 %v315, %v314
    %v352 = vpack.c.b16 %v317, %v316
    %v353 = vpack.c.b16 %v319, %v318
    %v354 = vpack.c.b16 %v321, %v320
    %v355 = vpack.c.b16 %v323, %v322
    %v356 = vpack.c.b16 %v325, %v324
    %v357 = vpack.c.b16 %v327, %v326
    %v358 = vpack.c.b16 %v329, %v328
    %v359 = vpack.c.b16 %v331, %v330
    %v360 = vpack.c.b16 %v333, %v332
    %v361 = vpack.c.b16 %v335, %v334
    %v362 = vpack.c.b16 %v337, %v336
    %v363 = vpack.c.b16 %v339, %v338
    %388 = vmatprep.subr.bf16.mxu0 0
    %389 = vmatpush1.bf16.msra.mxu0 %v340
    %390 = vmatprep.subr.bf16.mxu0 0
    %391 = vmatpush1.bf16.msra.mxu0 %v341
    %392 = vmatprep.subr.bf16.mxu0 0
    %393 = vmatpush1.bf16.msra.mxu0 %v342
    %394 = vmatprep.subr.bf16.mxu0 0
    %395 = vmatpush1.bf16.msra.mxu0 %v343
    %396 = vmatprep.subr.bf16.mxu0 0
    %397 = vmatpush1.bf16.msra.mxu0 %v344
    %398 = vmatprep.subr.bf16.mxu0 0
    %399 = vmatpush1.bf16.msra.mxu0 %v345
    %400 = vmatprep.subr.bf16.mxu0 0
    %401 = vmatpush1.bf16.msra.mxu0 %v346
    %402 = vmatprep.subr.bf16.mxu0 0
    %403 = vmatpush1.bf16.msra.mxu0 %v347
    %404 = vmatprep.subr.bf16.mxu0 0
    %405 = vmatpush1.bf16.msra.mxu0 %v348
    %406 = vmatprep.subr.bf16.mxu0 0
    %407 = vmatpush1.bf16.msra.mxu0 %v349
    %408 = vmatprep.subr.bf16.mxu0 0
    %409 = vmatpush1.bf16.msra.mxu0 %v350
    %410 = vmatprep.subr.bf16.mxu0 0
    %411 = vmatpush1.bf16.msra.mxu0 %v351
    %412 = vmatprep.subr.bf16.mxu0 0
    %413 = vmatpush1.bf16.msra.mxu0 %v352
    %414 = vmatprep.subr.bf16.mxu0 0
    %415 = vmatpush1.bf16.msra.mxu0 %v353
    %416 = vmatprep.subr.bf16.mxu0 0
    %417 = vmatpush1.bf16.msra.mxu0 %v354
    %418 = vmatprep.subr.bf16.mxu0 0
    %419 = vmatpush1.bf16.msra.mxu0 %v355
    %420 = vmatprep.mubr.bf16.mxu0 %v191
    %421 = vmatmul.mubr.bf16.gmra.mrb[0].mxu0 %v190
    %v422 = vpop.f32.mrb[0].mxu0
    %v423 = vadd.f32 0.0, %v422
    %v424 = vpop.f32.mrb[0].mxu0
    %v425 = vpop.f32.mrb[0].mxu0
    %v426 = vadd.f32 0.0, %v425
    %v427 = vpop.f32.mrb[0].mxu0
    %428 = vmatprep.mubr.bf16.mxu0 %v194
    %429 = vmatmul.mubr.bf16.gmra.mrb[0].mxu0 %v193
    %v430 = vpop.f32.mrb[0].mxu0
    %v431 = vadd.f32 0.0, %v430
    %v432 = vpop.f32.mrb[0].mxu0
    %v433 = vpop.f32.mrb[0].mxu0
    %v434 = vadd.f32 0.0, %v433
    %v435 = vpop.f32.mrb[0].mxu0
    %436 = vdwg.mxu0
    %437 = vmatprep.subr.bf16.mxu0 0
    %438 = vmatpush1.bf16.msra.mxu0 %v356
    %439 = vmatprep.subr.bf16.mxu0 0
    %440 = vmatpush1.bf16.msra.mxu0 %v357
    %441 = vmatprep.subr.bf16.mxu0 0
    %442 = vmatpush1.bf16.msra.mxu0 %v358
    %443 = vmatprep.subr.bf16.mxu0 0
    %444 = vmatpush1.bf16.msra.mxu0 %v359
    %445 = vmatprep.subr.bf16.mxu0 0
    %446 = vmatpush1.bf16.msra.mxu0 %v360
    %447 = vmatprep.subr.bf16.mxu0 0
    %448 = vmatpush1.bf16.msra.mxu0 %v361
    %449 = vmatprep.subr.bf16.mxu0 0
    %450 = vmatpush1.bf16.msra.mxu0 %v362
    %451 = vmatprep.subr.bf16.mxu0 0
    %452 = vmatpush1.bf16.msra.mxu0 %v363
    %453 = vmatprep.subr.bf16.mxu0 0
    %454 = vmatpush1.bf16.msra.mxu0 0
    %455 = vmatprep.subr.bf16.mxu0 0
    %456 = vmatpush1.bf16.msra.mxu0 0
    %457 = vmatprep.subr.bf16.mxu0 0
    %458 = vmatpush1.bf16.msra.mxu0 0
    %459 = vmatprep.subr.bf16.mxu0 0
    %460 = vmatpush1.bf16.msra.mxu0 0
    %461 = vmatprep.subr.bf16.mxu0 0
    %462 = vmatpush1.bf16.msra.mxu0 0
    %463 = vmatprep.subr.bf16.mxu0 0
    %464 = vmatpush1.bf16.msra.mxu0 0
    %465 = vmatprep.subr.bf16.mxu0 0
    %466 = vmatpush1.bf16.msra.mxu0 0
    %467 = vmatprep.subr.bf16.mxu0 0
    %468 = vmatpush1.bf16.msra.mxu0 0
    %469 = vmatprep.mubr.bf16.mxu0 0
    %470 = vmatmul.mubr.bf16.gmra.mrb[0].mxu0 %v192
    %v471 = vpop.f32.mrb[0].mxu0
    %v472 = vadd.f32 %v423, %v471
    %v473 = vpop.f32.mrb[0].mxu0
    %v474 = vpop.f32.mrb[0].mxu0
    %v475 = vadd.f32 %v426, %v474
    %v476 = vpop.f32.mrb[0].mxu0
    %477 = vmatprep.mubr.bf16.mxu0 0
    %478 = vmatmul.mubr.bf16.gmra.mrb[0].mxu0 %v195
    %v479 = vpop.f32.mrb[0].mxu0
    %v480 = vadd.f32 %v431, %v479
    %v481 = vpop.f32.mrb[0].mxu0
    %v482 = vpop.f32.mrb[0].mxu0
    %v483 = vadd.f32 %v434, %v482
    %v484 = vpop.f32.mrb[0].mxu0
    %485 = vdwg.mxu0
    %v486 = vld [vmem:[#allocation8] sm:$0x1]
    %v488 = vlaneseq
    %v489 = vshrl.u32 %v488, 7
    %v490 = vsub.s32 0, %v489
    %v491 = vrot.slane %v486, %v490
    %v493 = vmul.f32 %v472, %v491
    %v494 = vmul.f32 %v475, %v491
    %v495 = vmul.f32 %v480, %v491
    %v496 = vmul.f32 %v483, %v491
    %v497 = vld [vmem:[#allocation9] sm:$0x1]
    %v499 = vlaneseq
    %v500 = vshrl.u32 %v499, 7
    %v501 = vsub.s32 0, %v500
    %v502 = vrot.slane %v497, %v501
    %v504 = vadd.f32 %v493, %v502
    %v505 = vadd.f32 %v494, %v502
    %v506 = vadd.f32 %v495, %v502
    %v507 = vadd.f32 %v496, %v502
    %v508 = vmax.f32 %v504, 0.0
    %v509 = vmax.f32 %v505, 0.0
    %v510 = vmax.f32 %v506, 0.0
    %v511 = vmax.f32 %v507, 0.0
    %v512 = vpack.c.bf16 %v509, %v508
    %v513 = vpack.c.bf16 %v511, %v510
    %v515 = vshrl.u32 %v512, 16
    %v517 = vrot.slane %v515, 7
    %v518 = vshll.u32 %v512, 16
    %v520 = vor.u32 %v517, %v518
    %v522 = vshrl.u32 %v513, 16
    %v524 = vrot.slane %v522, 7
    %v525 = vshll.u32 %v513, 16
    %v527 = vor.u32 %v524, %v525
    %v530 = vld [vmem:[#allocation2] sm:$0xff]
    %v531 = vsel %vm156, %v520, %v530
    %532 = vst [vmem:[#allocation2] sm:$0xff] %v531
    %v533 = vld [vmem:[#allocation2 + $0x18] sm:$0xff]
    %v534 = vsel %vm156, %v527, %v533
    %535 = vst [vmem:[#allocation2 + $0x18] sm:$0xff] %v534
    %536 = vst [vmem:[#allocation2 + $0x8] sm:$0xff] %v512
    %537 = vst [vmem:[#allocation2 + $0x20] sm:$0xff] %v513
    %v538 = vrot.slane %v518, 1
    %v539 = vor.u32 %v515, %v538
    %v540 = vrot.slane %v525, 1
    %v541 = vor.u32 %v522, %v540
    %v544 = vld [vmem:[#allocation2 + $0x10] sm:$0xff]
    %v545 = vsel %vm174, %v539, %v544
    %546 = vst [vmem:[#allocation2 + $0x10] sm:$0xff] %v545
    %v547 = vld [vmem:[#allocation2 + $0x28] sm:$0xff]
    %v548 = vsel %vm174, %v541, %v547
    %549 = vst [vmem:[#allocation2 + $0x28] sm:$0xff] %v548
    %v550 = vld [vmem:[#allocation2] sm:$0xff]
    %v551 = vld [vmem:[#allocation2 + $0x8] sm:$0xff]
    %v552 = vld [vmem:[#allocation2 + $0x10] sm:$0xff]
    %v553 = vld [vmem:[#allocation2 + $0x18] sm:$0xff]
    %v554 = vld [vmem:[#allocation2 + $0x20] sm:$0xff]
    %v555 = vld [vmem:[#allocation2 + $0x28] sm:$0xff]
    %v556 = vld [vmem:[#allocation11] sm:$0xf]
    %v557 = vld [vmem:[#allocation11 + $0x4] sm:$0xf]
    %v558 = vld [vmem:[#allocation11 + $0x8] sm:$0xf]
    %v559 = vld [vmem:[#allocation11 + $0xc] sm:$0xf]
    %v560 = vld [vmem:[#allocation11 + $0x10] sm:$0xf]
    %v561 = vld [vmem:[#allocation11 + $0x14] sm:$0xf]
    %v562 = vld [vmem:[#allocation11 + $0x18] sm:$0xf]
    %v563 = vld [vmem:[#allocation11 + $0x1c] sm:$0xf]
    %v564 = vld [vmem:[#allocation11 + $0x20] sm:$0xf]
    %v565 = vld [vmem:[#allocation11 + $0x24] sm:$0xf]
    %v566 = vld [vmem:[#allocation11 + $0x28] sm:$0xf]
    %v567 = vld [vmem:[#allocation11 + $0x2c] sm:$0xf]
    %v568 = vld [vmem:[#allocation11 + $0x30] sm:$0xf]
    %v569 = vld [vmem:[#allocation11 + $0x34] sm:$0xf]
    %v570 = vld [vmem:[#allocation11 + $0x38] sm:$0xf]
    %v571 = vld [vmem:[#allocation11 + $0x3c] sm:$0xf]
    %v572 = vld [vmem:[#allocation11 + $0x40] sm:$0xf]
    %v573 = vld [vmem:[#allocation11 + $0x44] sm:$0xf]
    %v574 = vld [vmem:[#allocation11 + $0x48] sm:$0xf]
    %v575 = vld [vmem:[#allocation11 + $0x4c] sm:$0xf]
    %v576 = vld [vmem:[#allocation11 + $0x50] sm:$0xf]
    %v577 = vld [vmem:[#allocation11 + $0x54] sm:$0xf]
    %v578 = vld [vmem:[#allocation11 + $0x58] sm:$0xf]
    %v579 = vld [vmem:[#allocation11 + $0x5c] sm:$0xf]
    %v580 = vld [vmem:[#allocation11 + $0x60] sm:$0xf]
    %v581 = vld [vmem:[#allocation11 + $0x64] sm:$0xf]
    %v582 = vld [vmem:[#allocation11 + $0x68] sm:$0xf]
    %v583 = vld [vmem:[#allocation11 + $0x6c] sm:$0xf]
    %v584 = vld [vmem:[#allocation11 + $0x70] sm:$0xf]
    %v585 = vld [vmem:[#allocation11 + $0x74] sm:$0xf]
    %v586 = vld [vmem:[#allocation11 + $0x78] sm:$0xf]
    %v587 = vld [vmem:[#allocation11 + $0x7c] sm:$0xf]
    %v588 = vld [vmem:[#allocation11 + $0x80] sm:$0xf]
    %v589 = vld [vmem:[#allocation11 + $0x84] sm:$0xf]
    %v590 = vld [vmem:[#allocation11 + $0x88] sm:$0xf]
    %v591 = vld [vmem:[#allocation11 + $0x8c] sm:$0xf]
    %v592 = vld [vmem:[#allocation11 + $0x90] sm:$0xf]
    %v593 = vld [vmem:[#allocation11 + $0x94] sm:$0xf]
    %v594 = vld [vmem:[#allocation11 + $0x98] sm:$0xf]
    %v595 = vld [vmem:[#allocation11 + $0x9c] sm:$0xf]
    %v596 = vld [vmem:[#allocation11 + $0xa0] sm:$0xf]
    %v597 = vld [vmem:[#allocation11 + $0xa4] sm:$0xf]
    %v598 = vld [vmem:[#allocation11 + $0xa8] sm:$0xf]
    %v599 = vld [vmem:[#allocation11 + $0xac] sm:$0xf]
    %v600 = vld [vmem:[#allocation11 + $0xb0] sm:$0xf]
    %v601 = vld [vmem:[#allocation11 + $0xb4] sm:$0xf]
    %v602 = vld [vmem:[#allocation11 + $0xb8] sm:$0xf]
    %v603 = vld [vmem:[#allocation11 + $0xbc] sm:$0xf]
    %v652 = vunpack.c.l.b16 %v556
    %v653 = vunpack.c.l.b16 %v557
    %v654 = vunpack.c.l.b16 %v558
    %v655 = vunpack.c.l.b16 %v559
    %v656 = vunpack.c.l.b16 %v560
    %v657 = vunpack.c.l.b16 %v561
    %v658 = vunpack.c.l.b16 %v562
    %v659 = vunpack.c.l.b16 %v563
    %v660 = vunpack.c.l.b16 %v564
    %v661 = vunpack.c.l.b16 %v565
    %v662 = vunpack.c.l.b16 %v566
    %v663 = vunpack.c.l.b16 %v567
    %v664 = vunpack.c.l.b16 %v568
    %v665 = vunpack.c.l.b16 %v569
    %v666 = vunpack.c.l.b16 %v570
    %v667 = vunpack.c.l.b16 %v571
    %v668 = vunpack.c.l.b16 %v572
    %v669 = vunpack.c.l.b16 %v573
    %v670 = vunpack.c.l.b16 %v574
    %v671 = vunpack.c.l.b16 %v575
    %v672 = vunpack.c.l.b16 %v576
    %v673 = vunpack.c.l.b16 %v577
    %v674 = vunpack.c.l.b16 %v578
    %v675 = vunpack.c.l.b16 %v579
    %v676 = vunpack.c.l.b16 %v580
    %v677 = vunpack.c.l.b16 %v581
    %v678 = vunpack.c.l.b16 %v582
    %v679 = vunpack.c.l.b16 %v583
    %v680 = vunpack.c.l.b16 %v584
    %v681 = vunpack.c.l.b16 %v585
    %v682 = vunpack.c.l.b16 %v586
    %v683 = vunpack.c.l.b16 %v587
    %v684 = vunpack.c.l.b16 %v588
    %v685 = vunpack.c.l.b16 %v589
    %v686 = vunpack.c.l.b16 %v590
    %v687 = vunpack.c.l.b16 %v591
    %v688 = vunpack.c.l.b16 %v592
    %v689 = vunpack.c.l.b16 %v593
    %v690 = vunpack.c.l.b16 %v594
    %v691 = vunpack.c.l.b16 %v595
    %v692 = vunpack.c.l.b16 %v596
    %v693 = vunpack.c.l.b16 %v597
    %v694 = vunpack.c.l.b16 %v598
    %v695 = vunpack.c.l.b16 %v599
    %v696 = vunpack.c.l.b16 %v600
    %v697 = vunpack.c.l.b16 %v601
    %v698 = vunpack.c.l.b16 %v602
    %v699 = vunpack.c.l.b16 %v603
    %v700 = vpack.c.b16 %v653, %v652
    %v701 = vpack.c.b16 %v655, %v654
    %v702 = vpack.c.b16 %v657, %v656
    %v703 = vpack.c.b16 %v659, %v658
    %v704 = vpack.c.b16 %v661, %v660
    %v705 = vpack.c.b16 %v663, %v662
    %v706 = vpack.c.b16 %v665, %v664
    %v707 = vpack.c.b16 %v667, %v666
    %v708 = vpack.c.b16 %v669, %v668
    %v709 = vpack.c.b16 %v671, %v670
    %v710 = vpack.c.b16 %v673, %v672
    %v711 = vpack.c.b16 %v675, %v674
    %v712 = vpack.c.b16 %v677, %v676
    %v713 = vpack.c.b16 %v679, %v678
    %v714 = vpack.c.b16 %v681, %v680
    %v715 = vpack.c.b16 %v683, %v682
    %v716 = vpack.c.b16 %v685, %v684
    %v717 = vpack.c.b16 %v687, %v686
    %v718 = vpack.c.b16 %v689, %v688
    %v719 = vpack.c.b16 %v691, %v690
    %v720 = vpack.c.b16 %v693, %v692
    %v721 = vpack.c.b16 %v695, %v694
    %v722 = vpack.c.b16 %v697, %v696
    %v723 = vpack.c.b16 %v699, %v698
    %748 = vmatprep.subr.bf16.mxu0 0
    %749 = vmatpush1.bf16.msra.mxu0 %v700
    %750 = vmatprep.subr.bf16.mxu0 0
    %751 = vmatpush1.bf16.msra.mxu0 %v701
    %752 = vmatprep.subr.bf16.mxu0 0
    %753 = vmatpush1.bf16.msra.mxu0 %v702
    %754 = vmatprep.subr.bf16.mxu0 0
    %755 = vmatpush1.bf16.msra.mxu0 %v703
    %756 = vmatprep.subr.bf16.mxu0 0
    %757 = vmatpush1.bf16.msra.mxu0 %v704
    %758 = vmatprep.subr.bf16.mxu0 0
    %759 = vmatpush1.bf16.msra.mxu0 %v705
    %760 = vmatprep.subr.bf16.mxu0 0
    %761 = vmatpush1.bf16.msra.mxu0 %v706
    %762 = vmatprep.subr.bf16.mxu0 0
    %763 = vmatpush1.bf16.msra.mxu0 %v707
    %764 = vmatprep.subr.bf16.mxu0 0
    %765 = vmatpush1.bf16.msra.mxu0 %v708
    %766 = vmatprep.subr.bf16.mxu0 0
    %767 = vmatpush1.bf16.msra.mxu0 %v709
    %768 = vmatprep.subr.bf16.mxu0 0
    %769 = vmatpush1.bf16.msra.mxu0 %v710
    %770 = vmatprep.subr.bf16.mxu0 0
    %771 = vmatpush1.bf16.msra.mxu0 %v711
    %772 = vmatprep.subr.bf16.mxu0 0
    %773 = vmatpush1.bf16.msra.mxu0 %v712
    %774 = vmatprep.subr.bf16.mxu0 0
    %775 = vmatpush1.bf16.msra.mxu0 %v713
    %776 = vmatprep.subr.bf16.mxu0 0
    %777 = vmatpush1.bf16.msra.mxu0 %v714
    %778 = vmatprep.subr.bf16.mxu0 0
    %779 = vmatpush1.bf16.msra.mxu0 %v715
    %780 = vmatprep.mubr.bf16.mxu0 %v551
    %781 = vmatmul.mubr.bf16.gmra.mrb[0].mxu0 %v550
    %v782 = vpop.f32.mrb[0].mxu0
    %v783 = vadd.f32 0.0, %v782
    %v784 = vpop.f32.mrb[0].mxu0
    %v785 = vpop.f32.mrb[0].mxu0
    %v786 = vadd.f32 0.0, %v785
    %v787 = vpop.f32.mrb[0].mxu0
    %788 = vmatprep.mubr.bf16.mxu0 %v554
    %789 = vmatmul.mubr.bf16.gmra.mrb[0].mxu0 %v553
    %v790 = vpop.f32.mrb[0].mxu0
    %v791 = vadd.f32 0.0, %v790
    %v792 = vpop.f32.mrb[0].mxu0
    %v793 = vpop.f32.mrb[0].mxu0
    %v794 = vadd.f32 0.0, %v793
    %v795 = vpop.f32.mrb[0].mxu0
    %796 = vdwg.mxu0
    %797 = vmatprep.subr.bf16.mxu0 0
    %798 = vmatpush1.bf16.msra.mxu0 %v716
    %799 = vmatprep.subr.bf16.mxu0 0
    %800 = vmatpush1.bf16.msra.mxu0 %v717
    %801 = vmatprep.subr.bf16.mxu0 0
    %802 = vmatpush1.bf16.msra.mxu0 %v718
    %803 = vmatprep.subr.bf16.mxu0 0
    %804 = vmatpush1.bf16.msra.mxu0 %v719
    %805 = vmatprep.subr.bf16.mxu0 0
    %806 = vmatpush1.bf16.msra.mxu0 %v720
    %807 = vmatprep.subr.bf16.mxu0 0
    %808 = vmatpush1.bf16.msra.mxu0 %v721
    %809 = vmatprep.subr.bf16.mxu0 0
    %810 = vmatpush1.bf16.msra.mxu0 %v722
    %811 = vmatprep.subr.bf16.mxu0 0
    %812 = vmatpush1.bf16.msra.mxu0 %v723
    %813 = vmatprep.subr.bf16.mxu0 0
    %814 = vmatpush1.bf16.msra.mxu0 0
    %815 = vmatprep.subr.bf16.mxu0 0
    %816 = vmatpush1.bf16.msra.mxu0 0
    %817 = vmatprep.subr.bf16.mxu0 0
    %818 = vmatpush1.bf16.msra.mxu0 0
    %819 = vmatprep.subr.bf16.mxu0 0
    %820 = vmatpush1.bf16.msra.mxu0 0
    %821 = vmatprep.subr.bf16.mxu0 0
    %822 = vmatpush1.bf16.msra.mxu0 0
    %823 = vmatprep.subr.bf16.mxu0 0
    %824 = vmatpush1.bf16.msra.mxu0 0
    %825 = vmatprep.subr.bf16.mxu0 0
    %826 = vmatpush1.bf16.msra.mxu0 0
    %827 = vmatprep.subr.bf16.mxu0 0
    %828 = vmatpush1.bf16.msra.mxu0 0
    %829 = vmatprep.mubr.bf16.mxu0 0
    %830 = vmatmul.mubr.bf16.gmra.mrb[0].mxu0 %v552
    %v831 = vpop.f32.mrb[0].mxu0
    %v832 = vadd.f32 %v783, %v831
    %v833 = vpop.f32.mrb[0].mxu0
    %v834 = vpop.f32.mrb[0].mxu0
    %v835 = vadd.f32 %v786, %v834
    %v836 = vpop.f32.mrb[0].mxu0
    %837 = vmatprep.mubr.bf16.mxu0 0
    %838 = vmatmul.mubr.bf16.gmra.mrb[0].mxu0 %v555
    %v839 = vpop.f32.mrb[0].mxu0
    %v840 = vadd.f32 %v791, %v839
    %v841 = vpop.f32.mrb[0].mxu0
    %v842 = vpop.f32.mrb[0].mxu0
    %v843 = vadd.f32 %v794, %v842
    %v844 = vpop.f32.mrb[0].mxu0
    %845 = vdwg.mxu0
    %v846 = vunpack.c.l.bf16 %v115
    %v847 = vunpack.c.l.bf16 %v116
    %v848 = vunpack.c.l.bf16 %v117
    %v849 = vunpack.c.l.bf16 %v118
    %v850 = vld [vmem:[#allocation12] sm:$0x1]
    %v852 = vlaneseq
    %v853 = vshrl.u32 %v852, 7
    %v854 = vsub.s32 0, %v853
    %v855 = vrot.slane %v850, %v854
    %v857 = vmul.f32 %v832, %v855
    %v858 = vmul.f32 %v835, %v855
    %v859 = vmul.f32 %v840, %v855
    %v860 = vmul.f32 %v843, %v855
    %v861 = vld [vmem:[#allocation14] sm:$0x1]
    %v863 = vlaneseq
    %v864 = vshrl.u32 %v863, 7
    %v865 = vsub.s32 0, %v864
    %v866 = vrot.slane %v861, %v865
    %v868 = vadd.f32 %v857, %v866
    %v869 = vadd.f32 %v858, %v866
    %v870 = vadd.f32 %v859, %v866
    %v871 = vadd.f32 %v860, %v866
    %v872 = vadd.f32 %v868, %v846
    %v873 = vadd.f32 %v869, %v847
    %v874 = vadd.f32 %v870, %v848
    %v875 = vadd.f32 %v871, %v849
    %v876 = vmax.f32 %v872, 0.0
    %v877 = vmax.f32 %v873, 0.0
    %v878 = vmax.f32 %v874, 0.0
    %v879 = vmax.f32 %v875, 0.0
    %880 = vst [vmem:[#allocation15] sm:$0xff] %v876
    %881 = vst [vmem:[#allocation15 + $0x8] sm:$0xff] %v877
    %882 = vst [vmem:[#allocation15 + $0x10] sm:$0xff] %v878
    %883 = vst [vmem:[#allocation15 + $0x18] sm:$0xff] %v879
    // Predicated region
    $region58: #{basic_block_nchw.1} parent=1 // pred_check
      _
    $region59: #{basic_block_nchw.1} parent=1 // pred_check_branch
      %885 = sbr.rel (0) target = $region61
    $region60: #{basic_block_nchw.1} parent=1 // pred_region
      %s887 = ssub.s32 512, 512
      %888 = vsyncadd [#allocation5], %s887
      %s889 = sshll.u32 [#allocation15], 4
      %s890 = int_to_ptr.vmem [resolvable:$true] %s889
      %895 = dma.vmem_to_hbm [thread:$0]  %s890, 512, %s7, [#allocation5], 128, 128, 8
    $region61: #{basic_block_nchw.1} parent=1 // pred_fallthru
      _
    // Predicated region
    $region62: #{basic_block_nchw.1} parent=1 // pred_check
      _
    $region63: #{basic_block_nchw.1} parent=1 // pred_check_branch
      %897 = sbr.rel (0) target = $region65
    $region64: #{basic_block_nchw.1} parent=1 // pred_region
      %898 = dma.done [#allocation5], 512
    $region65: #{basic_block_nchw.1} parent=1 // pred_fallthru
      _
    %899 = vsyncpa [#allocation4], 1
    %900 = vsyncpa [#allocation7], 1
    %901 = vsyncpa [#allocation10], 1
    %902 = vsyncpa [#allocation13], 1
    %903 = vsyncpa [#allocation5], 1

</llo_original>
